<compile_context>
chip_gen: v7x
topology: tpu7x:2x2x1
jax: 0.10.0
libtpu: 0.0.40
codegen_flags: <defaults>
</compile_context>

<pallas_src>
import functools
import math

import jax
import jax.numpy as jnp
from jax.experimental import pallas as pl
from jax.experimental.pallas import tpu as pltpu

LEAKY_SLOPE = 0.01          # F.leaky_relu default negative_slope
BN_EPS = 1e-5               # nn.BatchNorm1d default eps
LANE = 128                  # TPU lane width -> lane-dense feature padding
ROW_TILE = 256              # A row tile (tm): works on v5e/v6e, fits v7x 64 MiB VMEM
K_TILE = 256                # A contraction tile (tk)
VMEM_LIMIT = 48 * 1024 * 1024


def _round_up(x, m):
    return ((x + m - 1) // m) * m


def _pad2d(x, rows, cols):
    r, c = x.shape
    return jnp.pad(x, ((0, rows - r), (0, cols - c)))


def _leaky(x):
    return jnp.where(x > 0, x, LEAKY_SLOPE * x)


# ----------------------------------------------------------------------------
# Kernel 1: fused input projections  (fc_embedding || fc_user) -> [N, 2F_pad]
# ----------------------------------------------------------------------------
def _dual_proj_kernel(xe_ref, we_ref, be_ref, xu_ref, wu_ref, bu_ref, o_ref, *, f_pad):
    he = jnp.dot(xe_ref[...], we_ref[...], preferred_element_type=jnp.float32) + be_ref[...]
    hu = jnp.dot(xu_ref[...], wu_ref[...], preferred_element_type=jnp.float32) + bu_ref[...]
    o_ref[:, :f_pad] = he.astype(o_ref.dtype)      # propagation branch (lanes 0:F_pad)
    o_ref[:, f_pad:] = hu.astype(o_ref.dtype)      # user branch        (lanes F_pad:2F_pad)


def dual_projection(x_emb, w_emb, b_emb, x_user, w_user, b_user, f_pad, row_tile):
    n_pad, e_pad = x_emb.shape
    u_pad = x_user.shape[1]
    grid = (n_pad // row_tile,)
    return pl.pallas_call(
        functools.partial(_dual_proj_kernel, f_pad=f_pad),
        out_shape=jax.ShapeDtypeStruct((n_pad, 2 * f_pad), jnp.bfloat16),
        grid_spec=pltpu.PrefetchScalarGridSpec(
            num_scalar_prefetch=0,
            grid=grid,
            in_specs=[
                pl.BlockSpec((row_tile, e_pad), lambda i: (i, 0)),
                pl.BlockSpec((e_pad, f_pad), lambda i: (0, 0)),
                pl.BlockSpec((1, f_pad), lambda i: (0, 0)),
                pl.BlockSpec((row_tile, u_pad), lambda i: (i, 0)),
                pl.BlockSpec((u_pad, f_pad), lambda i: (0, 0)),
                pl.BlockSpec((1, f_pad), lambda i: (0, 0)),
            ],
            out_specs=pl.BlockSpec((row_tile, 2 * f_pad), lambda i: (i, 0)),
        ),
        compiler_params=pltpu.CompilerParams(
            dimension_semantics=("parallel",),
            vmem_limit_bytes=VMEM_LIMIT),
    )(x_emb, w_emb, b_emb, x_user, w_user, b_user)


# ----------------------------------------------------------------------------
# Kernel 2: per-layer XW (both branches at once via block-diagonal weight)
# ----------------------------------------------------------------------------
def _xw_kernel(x_ref, w_ref, o_ref):
    o_ref[...] = jnp.dot(x_ref[...], w_ref[...],
                         preferred_element_type=jnp.float32).astype(o_ref.dtype)


def dual_xw(x_cat, w_block, row_tile):
    n_pad, f2 = x_cat.shape
    grid = (n_pad // row_tile,)
    return pl.pallas_call(
        _xw_kernel,
        out_shape=jax.ShapeDtypeStruct((n_pad, f2), jnp.bfloat16),
        grid_spec=pltpu.PrefetchScalarGridSpec(
            num_scalar_prefetch=0,
            grid=grid,
            in_specs=[pl.BlockSpec((row_tile, f2), lambda i: (i, 0)),
                      pl.BlockSpec((f2, f2), lambda i: (0, 0))],
            out_specs=pl.BlockSpec((row_tile, f2), lambda i: (i, 0)),
        ),
        compiler_params=pltpu.CompilerParams(
            dimension_semantics=("parallel",),
            vmem_limit_bytes=VMEM_LIMIT),
    )(x_cat, w_block)


# ----------------------------------------------------------------------------
# Kernel 3: tiled dual-branch GCN aggregation  H = leaky_relu(A @ Z + b')
#   (BatchNorm already folded into Z's weights and b'; dropout(eval)=identity)
# ----------------------------------------------------------------------------
def _gcn_agg_kernel(a_ref, z_ref, b_ref, o_ref, acc_ref, *, k_tile):
    k = pl.program_id(1)

    @pl.when(k == 0)
    def _():
        acc_ref[...] = jnp.zeros_like(acc_ref)

    start = pl.multiple_of(k * k_tile, k_tile)
    zk = z_ref[pl.ds(start, k_tile), :]              # slice of the VMEM-resident XW
    acc_ref[...] += jnp.dot(a_ref[...], zk, preferred_element_type=jnp.float32)

    @pl.when(k == pl.num_programs(1) - 1)
    def _():
        h = acc_ref[...] + b_ref[...]                # BN-folded bias (post-aggregation)
        o_ref[...] = _leaky(h).astype(o_ref.dtype)


def gcn_layer(adj, z, bias, row_tile, k_tile):
    n_pad = adj.shape[0]
    f2 = z.shape[1]
    grid = (n_pad // row_tile, n_pad // k_tile)
    return pl.pallas_call(
        functools.partial(_gcn_agg_kernel, k_tile=k_tile),
        out_shape=jax.ShapeDtypeStruct((n_pad, f2), jnp.bfloat16),
        grid_spec=pltpu.PrefetchScalarGridSpec(
            num_scalar_prefetch=0,
            grid=grid,
            in_specs=[
                pl.BlockSpec((row_tile, k_tile), lambda i, k: (i, k)),   # A tile
                pl.BlockSpec((n_pad, f2), lambda i, k: (0, 0)),          # XW resident in VMEM
                pl.BlockSpec((1, f2), lambda i, k: (0, 0)),              # folded bias
            ],
            out_specs=pl.BlockSpec((row_tile, f2), lambda i, k: (i, 0)),
            scratch_shapes=[pltpu.VMEM((row_tile, f2), jnp.float32)],
        ),
        compiler_params=pltpu.CompilerParams(
            dimension_semantics=("parallel", "arbitrary"),
            vmem_limit_bytes=VMEM_LIMIT),
    )(adj, z, bias)


# ----------------------------------------------------------------------------
# Kernel 4: fused tail
#   pooled = M @ X   (Mean_nBatch for both branches at once: [B, 2F_pad])
#   text   = bert_pooler @ W_bert + b_bert
#   h      = leaky_relu(pooled @ W1[:2F] + text @ W1[2F:] + b1)
#   out    = sigmoid(h @ W2 + b2)
# ----------------------------------------------------------------------------
def _tail_kernel(pool_ref, x_ref, bert_ref, wb_ref, bb_ref,
                 w1pu_ref, w1t_ref, b1_ref, w2_ref, b2_ref,
                 o_ref, acc_ref):
    k = pl.program_id(0)

    @pl.when(k == 0)
    def _():
        acc_ref[...] = jnp.zeros_like(acc_ref)

    acc_ref[...] += jnp.dot(pool_ref[...], x_ref[...],
                            preferred_element_type=jnp.float32)

    @pl.when(k == pl.num_programs(0) - 1)
    def _():
        pooled = acc_ref[...].astype(jnp.bfloat16)                 # [B_pad, 2F_pad] = [x_p | x_u]
        tb = jnp.dot(bert_ref[...], wb_ref[...],
                     preferred_element_type=jnp.float32) + bb_ref[...]
        h = jnp.dot(pooled, w1pu_ref[...], preferred_element_type=jnp.float32)
        h = h + jnp.dot(tb.astype(jnp.bfloat16), w1t_ref[...],
                        preferred_element_type=jnp.float32)
        h = _leaky(h + b1_ref[...])                                # leaky_relu(fc_rumor_1)
        y = jnp.dot(h.astype(jnp.bfloat16), w2_ref[...],
                    preferred_element_type=jnp.float32) + b2_ref[...]
        o_ref[...] = jax.nn.sigmoid(y).astype(o_ref.dtype)         # sigmoid(fc_rumor_2)


def fused_tail(pool_mat, x_final, bert_pooler, wb, bb, w1pu, w1t, b1, w2, b2, k_tile):
    b_pad, n_pad = pool_mat.shape
    f2 = x_final.shape[1]
    bh_pad, f_pad = wb.shape
    c_pad = w2.shape[1]
    grid = (n_pad // k_tile,)
    return pl.pallas_call(
        _tail_kernel,
        out_shape=jax.ShapeDtypeStruct((b_pad, c_pad), jnp.float32),
        grid_spec=pltpu.PrefetchScalarGridSpec(
            num_scalar_prefetch=0,
            grid=grid,
            in_specs=[
                pl.BlockSpec((b_pad, k_tile), lambda k: (0, k)),    # pooling matrix tile
                pl.BlockSpec((k_tile, f2), lambda k: (k, 0)),       # activation tile
                pl.BlockSpec((b_pad, bh_pad), lambda k: (0, 0)),    # bert pooler output
                pl.BlockSpec((bh_pad, f_pad), lambda k: (0, 0)),    # bert_fc W
                pl.BlockSpec((1, f_pad), lambda k: (0, 0)),         # bert_fc b
                pl.BlockSpec((f2, f_pad), lambda k: (0, 0)),        # fc_rumor_1 rows for [x_p|x_u]
                pl.BlockSpec((f_pad, f_pad), lambda k: (0, 0)),     # fc_rumor_1 rows for text
                pl.BlockSpec((1, f_pad), lambda k: (0, 0)),         # fc_rumor_1 b
                pl.BlockSpec((f_pad, c_pad), lambda k: (0, 0)),     # fc_rumor_2 W
                pl.BlockSpec((1, c_pad), lambda k: (0, 0)),         # fc_rumor_2 b
            ],
            out_specs=pl.BlockSpec((b_pad, c_pad), lambda k: (0, 0)),
            scratch_shapes=[pltpu.VMEM((b_pad, f2), jnp.float32)],
        ),
        compiler_params=pltpu.CompilerParams(
            dimension_semantics=("arbitrary",),
            vmem_limit_bytes=VMEM_LIMIT),
    )(pool_mat, x_final, bert_pooler, wb, bb, w1pu, w1t, b1, w2, b2)


# ----------------------------------------------------------------------------
# Parameter construction (deterministic, mirrors module __init__ shapes)
# ----------------------------------------------------------------------------
def _linear_init(key, fan_in, fan_out):
    k1, k2 = jax.random.split(key)
    lim = 1.0 / jnp.sqrt(jnp.float32(fan_in))
    w = jax.random.uniform(k1, (fan_in, fan_out), jnp.float32, -lim, lim)
    b = jax.random.uniform(k2, (1, fan_out), jnp.float32, -lim, lim)
    return w, b


def init_params(key, vocab, emb_dim, n_feature, user_features, bert_hidden,
                n_hidden, n_class):
    keys = jax.random.split(key, 8 + 2 * n_hidden)
    params = {}
    params["embedding"] = jax.random.normal(keys[0], (vocab, emb_dim), jnp.float32)
    params["fc_embedding"] = _linear_init(keys[1], emb_dim, n_feature)
    params["fc_user"] = _linear_init(keys[2], user_features, n_feature)
    params["bert_fc"] = _linear_init(keys[3], bert_hidden, n_feature)
    params["fc_rumor_1"] = _linear_init(keys[4], n_feature * 3, n_feature)
    params["fc_rumor_2"] = _linear_init(keys[5], n_feature, n_class)

    def gcn_layer_init(k):
        w, b = _linear_init(k, n_feature, n_feature)
        gamma = jnp.ones((1, n_feature), jnp.float32)
        beta = jnp.zeros((1, n_feature), jnp.float32)
        mu = jnp.zeros((1, n_feature), jnp.float32)
        var = jnp.ones((1, n_feature), jnp.float32)
        return (w, b, gamma, beta, mu, var)

    params["gcn_prop"] = [gcn_layer_init(keys[6 + i]) for i in range(n_hidden)]
    params["gcn_user"] = [gcn_layer_init(keys[6 + n_hidden + i]) for i in range(n_hidden)]
    return params


def prepare_params(params, emb_dim, n_feature, user_features, bert_hidden, n_class):
    """Pad to lane-dense shapes, fold BatchNorm into GCN weights, cast to bf16."""
    f_pad = _round_up(n_feature, LANE)
    e_pad = _round_up(emb_dim, LANE)
    u_pad = _round_up(user_features, LANE)
    bh_pad = _round_up(bert_hidden, LANE)
    c_pad = _round_up(n_class, LANE)
    f2 = 2 * f_pad

    prepared = {}
    emb = params["embedding"]
    prepared["embedding"] = _pad2d(emb, emb.shape[0], e_pad).astype(jnp.bfloat16)

    we, be = params["fc_embedding"]
    prepared["fc_embedding"] = (_pad2d(we, e_pad, f_pad).astype(jnp.bfloat16),
                                _pad2d(be, 1, f_pad))
    wu, bu = params["fc_user"]
    prepared["fc_user"] = (_pad2d(wu, u_pad, f_pad).astype(jnp.bfloat16),
                           _pad2d(bu, 1, f_pad))
    wb, bb = params["bert_fc"]
    prepared["bert_fc"] = (_pad2d(wb, bh_pad, f_pad).astype(jnp.bfloat16),
                           _pad2d(bb, 1, f_pad))

    # fc_rumor_1: split [3F, F] into the [x_p | x_u] slab and the text slab,
    # placed at the padded feature offsets (avoids jnp.concatenate in the tail).
    w1, b1 = params["fc_rumor_1"]
    w1pu = jnp.zeros((f2, f_pad), jnp.float32)
    w1pu = w1pu.at[:n_feature, :n_feature].set(w1[:n_feature])
    w1pu = w1pu.at[f_pad:f_pad + n_feature, :n_feature].set(w1[n_feature:2 * n_feature])
    w1t = jnp.zeros((f_pad, f_pad), jnp.float32)
    w1t = w1t.at[:n_feature, :n_feature].set(w1[2 * n_feature:])
    prepared["fc_rumor_1"] = (w1pu.astype(jnp.bfloat16), w1t.astype(jnp.bfloat16),
                              _pad2d(b1, 1, f_pad))

    w2, b2 = params["fc_rumor_2"]
    prepared["fc_rumor_2"] = (_pad2d(w2, f_pad, c_pad).astype(jnp.bfloat16),
                              _pad2d(b2, 1, c_pad))

    # GCN layers: fold inference-mode BatchNorm into W/b, build block-diagonal
    # weight covering both branches so one aggregation shares the A tiles.
    def fold(layer):
        w, b, gamma, beta, mu, var = layer
        s = gamma * jax.lax.rsqrt(var + BN_EPS)      # [1, F]
        return w * s, s * (b - mu) + beta            # W' (column-scaled), b'

    layers = []
    for lp, lu in zip(params["gcn_prop"], params["gcn_user"]):
        wp, bp = fold(lp)
        wu_, bu_ = fold(lu)
        w_block = jnp.zeros((f2, f2), jnp.float32)
        w_block = w_block.at[:n_feature, :n_feature].set(wp)
        w_block = w_block.at[f_pad:f_pad + n_feature, f_pad:f_pad + n_feature].set(wu_)
        b_block = jnp.zeros((1, f2), jnp.float32)
        b_block = b_block.at[:, :n_feature].set(bp)
        b_block = b_block.at[:, f_pad:f_pad + n_feature].set(bu_)
        layers.append((w_block.astype(jnp.bfloat16), b_block))
    prepared["gcn_layers"] = layers

    prepared["dims"] = dict(f_pad=f_pad, e_pad=e_pad, u_pad=u_pad,
                            bh_pad=bh_pad, c_pad=c_pad)
    return prepared


# ----------------------------------------------------------------------------
# Forward pass
# ----------------------------------------------------------------------------
def dual_static_gcn_forward(prepared, node_idx, user_feats, bert_pooler, adj,
                            pool_mat, n_class, row_tile=ROW_TILE, k_tile=K_TILE):
    dims = prepared["dims"]
    f_pad = dims["f_pad"]
    u_pad = dims["u_pad"]
    bh_pad = dims["bh_pad"]

    n = node_idx.shape[0]
    b = bert_pooler.shape[0]
    tile_lcm = row_tile * k_tile // math.gcd(row_tile, k_tile)
    n_pad = _round_up(n, tile_lcm)
    b_pad = _round_up(b, 8)

    # Wrapper-side glue: embedding gather, zero-padding, bf16 casts (no compute).
    x_emb = jnp.take(prepared["embedding"], node_idx, axis=0)          # [N, E_pad] bf16
    x_emb = jnp.pad(x_emb, ((0, n_pad - n), (0, 0)))
    x_user = _pad2d(user_feats, n_pad, u_pad).astype(jnp.bfloat16)
    adj_p = _pad2d(adj, n_pad, n_pad).astype(jnp.bfloat16)
    pool_p = _pad2d(pool_mat, b_pad, n_pad).astype(jnp.bfloat16)
    bert_p = _pad2d(bert_pooler, b_pad, bh_pad).astype(jnp.bfloat16)

    # Fused fc_embedding + fc_user projection: x = [x_propagation | x_user].
    we, be = prepared["fc_embedding"]
    wu, bu = prepared["fc_user"]
    x_cat = dual_projection(x_emb, we, be, x_user, wu, bu, f_pad, row_tile)

    # Stacked dual GCN layers (BN folded, dropout in eval mode = identity).
    for w_block, b_block in prepared["gcn_layers"]:
        z = dual_xw(x_cat, w_block, row_tile)          # XW for both branches, [N_pad, 2F_pad]
        x_cat = gcn_layer(adj_p, z, b_block, row_tile, k_tile)

    # Fused tail: Mean_nBatch for both branches + bert_fc + rumor head.
    wb, bb = prepared["bert_fc"]
    w1pu, w1t, b1 = prepared["fc_rumor_1"]
    w2, b2 = prepared["fc_rumor_2"]
    out = fused_tail(pool_p, x_cat, bert_p, wb, bb, w1pu, w1t, b1, w2, b2, k_tile)
    return out[:b, :n_class]


# ----------------------------------------------------------------------------
if __name__ == "__main__":
    # Small synthetic shapes consistent with the module's forward
    B = 2            # number of trees (data.root_idx / data.batch groups)
    N = 16           # total nodes across trees
    VOCAB = 20       # embedding table rows
    EMB_DIM = 48     # text_embedding.shape[1]
    N_FEATURE = 32   # config.hidden_dim
    USER_FEATURES = 10
    BERT_HIDDEN = 64
    N_HIDDEN = 2     # config.n_hidden
    N_CLASS = 4      # config.n_class

    key = jax.random.PRNGKey(0)
    k_param, k_idx, k_user, k_bert, k_adj = jax.random.split(key, 5)

    raw_params = init_params(k_param, VOCAB, EMB_DIM, N_FEATURE, USER_FEATURES,
                             BERT_HIDDEN, N_HIDDEN, N_CLASS)
    prepared = prepare_params(raw_params, EMB_DIM, N_FEATURE, USER_FEATURES,
                              BERT_HIDDEN, N_CLASS)

    # data.x -> node ids into the embedding table
    node_idx = jax.random.randint(k_idx, (N,), 0, VOCAB)
    # idx2user_dict lookups -> user feature matrix
    user_feats = jax.random.normal(k_user, (N, USER_FEATURES), jnp.float32)
    # BERT pooler_output per root tweet (BERT itself not translated)
    bert_pooler = jax.random.normal(k_bert, (B, BERT_HIDDEN), jnp.float32)

    # Dense adjacency built from (edge_index, edge_values) + self-loops (glue)
    adj = (jax.random.uniform(k_adj, (N, N)) > 0.7).astype(jnp.float32)
    adj = adj + jnp.eye(N, dtype=jnp.float32)
    adj = adj / jnp.maximum(adj.sum(axis=1, keepdims=True), 1.0)   # row-normalize

    # data.batch -> row-normalized pooling matrix (nodes 0..7 tree 0, 8..15 tree 1)
    batch_assign = jnp.concatenate([jnp.zeros(N // 2, jnp.int32),
                                    jnp.ones(N - N // 2, jnp.int32)])
    pool_mat = (batch_assign[None, :] == jnp.arange(B, dtype=jnp.int32)[:, None])
    pool_mat = pool_mat.astype(jnp.float32)
    pool_mat = pool_mat / pool_mat.sum(axis=1, keepdims=True)

    out = dual_static_gcn_forward(prepared, node_idx, user_feats, bert_pooler,
                                  adj, pool_mat, N_CLASS)
    out = jax.block_until_ready(out)
    assert out.shape == (B, N_CLASS)
    assert bool(jnp.all((out >= 0.0) & (out <= 1.0)))
    print("KERNEL_OK")
</pallas_src>

<mosaic_0001>
module attributes {stable_mosaic.version = 11 : i64} {
  func.func @_dual_proj_kernel(%arg0: i32, %arg1: memref<256x128xbf16, #tpu.memory_space<vmem>>, %arg2: memref<128x128xbf16, #tpu.memory_space<vmem>>, %arg3: memref<1x128xf32, #tpu.memory_space<vmem>>, %arg4: memref<256x128xbf16, #tpu.memory_space<vmem>>, %arg5: memref<128x128xbf16, #tpu.memory_space<vmem>>, %arg6: memref<1x128xf32, #tpu.memory_space<vmem>>, %arg7: memref<256x256xbf16, #tpu.memory_space<vmem>>) attributes {dimension_semantics = [#tpu.dimension_semantics<parallel>], iteration_bounds = array<i64: 1>, scalar_prefetch = 0 : i64, scratch_operands = 0 : i64, tpu.core_type = #tpu.core_type<tc>, window_params = [{transform_indices = @transform_0, window_bounds = array<i64: 256, 128>}, {pipeline_mode = #tpu.pipeline_mode<synchronous>, transform_indices = @transform_1, window_bounds = array<i64: 128, 128>}, {pipeline_mode = #tpu.pipeline_mode<synchronous>, transform_indices = @transform_2, window_bounds = array<i64: 1, 128>}, {transform_indices = @transform_3, window_bounds = array<i64: 256, 128>}, {pipeline_mode = #tpu.pipeline_mode<synchronous>, transform_indices = @transform_4, window_bounds = array<i64: 128, 128>}, {pipeline_mode = #tpu.pipeline_mode<synchronous>, transform_indices = @transform_5, window_bounds = array<i64: 1, 128>}, {transform_indices = @transform_6, window_bounds = array<i64: 256, 256>}]} {
    %c0 = arith.constant 0 : index
    %c0_0 = arith.constant 0 : index
    %0 = vector.load %arg1[%c0, %c0_0] : memref<256x128xbf16, #tpu.memory_space<vmem>>, vector<256x128xbf16>
    %c0_1 = arith.constant 0 : index
    %c0_2 = arith.constant 0 : index
    %1 = vector.load %arg2[%c0_1, %c0_2] : memref<128x128xbf16, #tpu.memory_space<vmem>>, vector<128x128xbf16>
    %cst = arith.constant dense<0.000000e+00> : vector<256x128xf32>
    %2 = tpu.matmul %0, %1, %cst {dimension_numbers = #tpu.dot_dimension_numbers<[1], [0], [0], [1], [0, 0, 1, 1], [], []>} : vector<256x128xbf16>, vector<128x128xbf16>, vector<256x128xf32> -> vector<256x128xf32>
    %c0_3 = arith.constant 0 : index
    %c0_4 = arith.constant 0 : index
    %3 = vector.load %arg3[%c0_3, %c0_4] : memref<1x128xf32, #tpu.memory_space<vmem>>, vector<1x128xf32>
    %4 = vector.broadcast %3 : vector<1x128xf32> to vector<256x128xf32>
    %5 = arith.addf %2, %4 : vector<256x128xf32>
    %c0_5 = arith.constant 0 : index
    %c0_6 = arith.constant 0 : index
    %6 = vector.load %arg4[%c0_5, %c0_6] : memref<256x128xbf16, #tpu.memory_space<vmem>>, vector<256x128xbf16>
    %c0_7 = arith.constant 0 : index
    %c0_8 = arith.constant 0 : index
    %7 = vector.load %arg5[%c0_7, %c0_8] : memref<128x128xbf16, #tpu.memory_space<vmem>>, vector<128x128xbf16>
    %cst_9 = arith.constant dense<0.000000e+00> : vector<256x128xf32>
    %8 = tpu.matmul %6, %7, %cst_9 {dimension_numbers = #tpu.dot_dimension_numbers<[1], [0], [0], [1], [0, 0, 1, 1], [], []>} : vector<256x128xbf16>, vector<128x128xbf16>, vector<256x128xf32> -> vector<256x128xf32>
    %c0_10 = arith.constant 0 : index
    %c0_11 = arith.constant 0 : index
    %9 = vector.load %arg6[%c0_10, %c0_11] : memref<1x128xf32, #tpu.memory_space<vmem>>, vector<1x128xf32>
    %10 = vector.broadcast %9 : vector<1x128xf32> to vector<256x128xf32>
    %11 = arith.addf %8, %10 : vector<256x128xf32>
    %12 = arith.truncf %5 : vector<256x128xf32> to vector<256x128xbf16>
    %c0_12 = arith.constant 0 : index
    %c0_13 = arith.constant 0 : index
    %13 = vector.load %arg7[%c0_12, %c0_13] : memref<256x256xbf16, #tpu.memory_space<vmem>>, vector<256x128xbf16>
    tpu.vector_store %arg7[%c0_12, %c0_13], %12 {strides = array<i32>} : memref<256x256xbf16, #tpu.memory_space<vmem>>, vector<256x128xbf16>,
    %14 = arith.truncf %11 : vector<256x128xf32> to vector<256x128xbf16>
    %c0_14 = arith.constant 0 : index
    %c128 = arith.constant 128 : index
    %15 = vector.load %arg7[%c0_14, %c128] : memref<256x256xbf16, #tpu.memory_space<vmem>>, vector<256x128xbf16>
    tpu.vector_store %arg7[%c0_14, %c128], %14 {strides = array<i32>} : memref<256x256xbf16, #tpu.memory_space<vmem>>, vector<256x128xbf16>,
    return
  }
  func.func @transform_0(%arg0: i32) -> (i32, i32) {
    %c0_i32 = arith.constant 0 : i32
    %c0_i32_0 = arith.constant 0 : i32
    return %arg0, %c0_i32 : i32, i32
  }
  func.func @transform_1(%arg0: i32) -> (i32, i32) {
    %c0_i32 = arith.constant 0 : i32
    %c0_i32_0 = arith.constant 0 : i32
    %c0_i32_1 = arith.constant 0 : i32
    return %c0_i32, %c0_i32_0 : i32, i32
  }
  func.func @transform_2(%arg0: i32) -> (i32, i32) {
    %c0_i32 = arith.constant 0 : i32
    %c0_i32_0 = arith.constant 0 : i32
    %c0_i32_1 = arith.constant 0 : i32
    return %c0_i32, %c0_i32_0 : i32, i32
  }
  func.func @transform_3(%arg0: i32) -> (i32, i32) {
    %c0_i32 = arith.constant 0 : i32
    %c0_i32_0 = arith.constant 0 : i32
    return %arg0, %c0_i32 : i32, i32
  }
  func.func @transform_4(%arg0: i32) -> (i32, i32) {
    %c0_i32 = arith.constant 0 : i32
    %c0_i32_0 = arith.constant 0 : i32
    %c0_i32_1 = arith.constant 0 : i32
    return %c0_i32, %c0_i32_0 : i32, i32
  }
  func.func @transform_5(%arg0: i32) -> (i32, i32) {
    %c0_i32 = arith.constant 0 : i32
    %c0_i32_0 = arith.constant 0 : i32
    %c0_i32_1 = arith.constant 0 : i32
    return %c0_i32, %c0_i32_0 : i32, i32
  }
  func.func @transform_6(%arg0: i32) -> (i32, i32) {
    %c0_i32 = arith.constant 0 : i32
    %c0_i32_0 = arith.constant 0 : i32
    return %arg0, %c0_i32 : i32, i32
  }
}

</mosaic_0001>

<llo_original>
// kernel: tpu_custom_call.1
$region0: #{tpu_custom_call.1}
  #allocation0 [shape = 'u32[]', space=smem, size = 0x4, offset = 0x4, fixed_abs, tag = 'smem constant byte address 0x4 - core index']
  #allocation1 [shape = 'u32[144,128]{1,0:T(1,128)}', space=vmem, size = 0x12000, scoped, tag = 'internal scratch']
  %s0 = inlined_call_operand.hbm [shape: bf16[256,128], index: 0, kind: input, shape index: {}]
  %s1 = inlined_call_operand.hbm [shape: bf16[128,128], index: 1, kind: input, shape index: {}]
  %s2 = inlined_call_operand.vmem [shape: f32[1,128], index: 2, kind: input, shape index: {}]
  %s3 = inlined_call_operand.hbm [shape: bf16[256,128], index: 3, kind: input, shape index: {}]
  %s4 = inlined_call_operand.hbm [shape: bf16[128,128], index: 4, kind: input, shape index: {}]
  %s5 = inlined_call_operand.vmem [shape: f32[1,128], index: 5, kind: input, shape index: {}]
  %s6 = inlined_call_operand.hbm [shape: bf16[256,256], index: 6, kind: output, shape index: {}]
  %s7 = sld [smem:[#allocation0]]
  $region50: #{tpu_custom_call.1} parent=0
    _
  %s9 = ssub.s32 1, %s7
  %s10 = scalar_select 0, %s9, %s7
  $region1: #{tpu_custom_call.1} parent=0
    #allocation2 [shape = 'u8[65536]{0}', space=vmem, size = 0x10000, scoped, tag = 'input window, operand 0, single buffered']
    #allocation3 [shape = 's32[1]{0}', space=sflag, size = 0x4, scoped, tag = 'scoped memory for tpu_custom_call.1']
    #allocation4 [shape = 's32[1]{0}', space=sflag, size = 0x4, scoped, tag = 'scoped memory for tpu_custom_call.1']
    #allocation5 [shape = 'u8[32768]{0}', space=vmem, size = 0x8000, scoped, tag = 'input window, operand 1, single buffered']
    #allocation6 [shape = 's32[1]{0}', space=sflag, size = 0x4, scoped, tag = 'scoped memory for tpu_custom_call.1']
    #allocation7 [shape = 'u8[65536]{0}', space=vmem, size = 0x10000, scoped, tag = 'input window, operand 3, single buffered']
    #allocation8 [shape = 'u8[32768]{0}', space=vmem, size = 0x8000, scoped, tag = 'input window, operand 4, single buffered']
    #allocation9 [shape = 's32[1]{0}', space=sflag, size = 0x4, scoped, tag = 'scoped memory for tpu_custom_call.1']
    #allocation10 [shape = 'u8[131072]{0}', space=vmem, size = 0x20000, scoped, tag = 'output window, operand 0, single buffered']
    %11 = vsyncpa [#allocation3], 0
    %12 = vsyncpa [#allocation6], 0
    %13 = vsyncpa [#allocation9], 0
    %14 = vsyncpa [#allocation4], 0
    // Predicated region
    $region2: #{tpu_custom_call.1} parent=1 // pred_check
      _
    $region3: #{tpu_custom_call.1} parent=1 // pred_check_branch
      %16 = sbr.rel (0) target = $region5
    $region4: #{tpu_custom_call.1} parent=1 // pred_region
      %s18 = ssub.s32 2048, 2048
      %19 = vsyncadd [#allocation3], %s18
      %s20 = sshll.u32 [#allocation2], 4
      %s21 = int_to_ptr.vmem [resolvable:$true] %s20
      %26 = dma.hbm_to_vmem [thread:$0]  %s0, 2048, %s21, [#allocation3], 64, 64, 4
    $region5: #{tpu_custom_call.1} parent=1 // pred_fallthru
      _
    // Predicated region
    $region6: #{tpu_custom_call.1} parent=1 // pred_check
      _
    $region7: #{tpu_custom_call.1} parent=1 // pred_check_branch
      %28 = sbr.rel (0) target = $region9
    $region8: #{tpu_custom_call.1} parent=1 // pred_region
      %s30 = ssub.s32 1024, 1024
      %31 = vsyncadd [#allocation6], %s30
      %s32 = sshll.u32 [#allocation5], 4
      %s33 = int_to_ptr.vmem [resolvable:$true] %s32
      %38 = dma.hbm_to_vmem [thread:$0]  %s1, 1024, %s33, [#allocation6], 64, 64, 4
    $region9: #{tpu_custom_call.1} parent=1 // pred_fallthru
      _
    // Predicated region
    $region10: #{tpu_custom_call.1} parent=1 // pred_check
      _
    $region11: #{tpu_custom_call.1} parent=1 // pred_check_branch
      %40 = sbr.rel (0) target = $region13
    $region12: #{tpu_custom_call.1} parent=1 // pred_region
      _
    $region13: #{tpu_custom_call.1} parent=1 // pred_fallthru
      _
    // Predicated region
    $region14: #{tpu_custom_call.1} parent=1 // pred_check
      _
    $region15: #{tpu_custom_call.1} parent=1 // pred_check_branch
      %42 = sbr.rel (0) target = $region17
    $region16: #{tpu_custom_call.1} parent=1 // pred_region
      %s44 = ssub.s32 2048, 2048
      %45 = vsyncadd [#allocation6], %s44
      %s46 = sshll.u32 [#allocation7], 4
      %s47 = int_to_ptr.vmem [resolvable:$true] %s46
      %52 = dma.hbm_to_vmem [thread:$0]  %s3, 2048, %s47, [#allocation6], 64, 64, 4
    $region17: #{tpu_custom_call.1} parent=1 // pred_fallthru
      _
    // Predicated region
    $region18: #{tpu_custom_call.1} parent=1 // pred_check
      _
    $region19: #{tpu_custom_call.1} parent=1 // pred_check_branch
      %54 = sbr.rel (0) target = $region21
    $region20: #{tpu_custom_call.1} parent=1 // pred_region
      %s56 = ssub.s32 1024, 1024
      %57 = vsyncadd [#allocation9], %s56
      %s58 = sshll.u32 [#allocation8], 4
      %s59 = int_to_ptr.vmem [resolvable:$true] %s58
      %64 = dma.hbm_to_vmem [thread:$0]  %s4, 1024, %s59, [#allocation9], 64, 64, 4
    $region21: #{tpu_custom_call.1} parent=1 // pred_fallthru
      _
    // Predicated region
    $region22: #{tpu_custom_call.1} parent=1 // pred_check
      _
    $region23: #{tpu_custom_call.1} parent=1 // pred_check_branch
      %66 = sbr.rel (0) target = $region25
    $region24: #{tpu_custom_call.1} parent=1 // pred_region
      _
    $region25: #{tpu_custom_call.1} parent=1 // pred_fallthru
      _
    // Predicated region
    $region26: #{tpu_custom_call.1} parent=1 // pred_check
      _
    $region27: #{tpu_custom_call.1} parent=1 // pred_check_branch
      %68 = sbr.rel (0) target = $region29
    $region28: #{tpu_custom_call.1} parent=1 // pred_region
      %69 = dma.done [#allocation3], 2048
    $region29: #{tpu_custom_call.1} parent=1 // pred_fallthru
      _
    // Predicated region
    $region30: #{tpu_custom_call.1} parent=1 // pred_check
      _
    $region31: #{tpu_custom_call.1} parent=1 // pred_check_branch
      %71 = sbr.rel (0) target = $region33
    $region32: #{tpu_custom_call.1} parent=1 // pred_region
      %72 = dma.done [#allocation6], 1024
    $region33: #{tpu_custom_call.1} parent=1 // pred_fallthru
      _
    // Predicated region
    $region34: #{tpu_custom_call.1} parent=1 // pred_check
      _
    $region35: #{tpu_custom_call.1} parent=1 // pred_check_branch
      %74 = sbr.rel (0) target = $region37
    $region36: #{tpu_custom_call.1} parent=1 // pred_region
      %75 = dma.done [#allocation6], 2048
    $region37: #{tpu_custom_call.1} parent=1 // pred_fallthru
      _
    // Predicated region
    $region38: #{tpu_custom_call.1} parent=1 // pred_check
      _
    $region39: #{tpu_custom_call.1} parent=1 // pred_check_branch
      %77 = sbr.rel (0) target = $region41
    $region40: #{tpu_custom_call.1} parent=1 // pred_region
      %78 = dma.done [#allocation9], 1024
    $region41: #{tpu_custom_call.1} parent=1 // pred_fallthru
      _
    %v80 = vld [vmem:[#allocation2] sm:$0xf]
    %v81 = vld [vmem:[#allocation2 + $0x4] sm:$0xf]
    %v82 = vld [vmem:[#allocation2 + $0x8] sm:$0xf]
    %v83 = vld [vmem:[#allocation2 + $0xc] sm:$0xf]
    %v84 = vld [vmem:[#allocation2 + $0x10] sm:$0xf]
    %v85 = vld [vmem:[#allocation2 + $0x14] sm:$0xf]
    %v86 = vld [vmem:[#allocation2 + $0x18] sm:$0xf]
    %v87 = vld [vmem:[#allocation2 + $0x1c] sm:$0xf]
    %v88 = vld [vmem:[#allocation2 + $0x20] sm:$0xf]
    %v89 = vld [vmem:[#allocation2 + $0x24] sm:$0xf]
    %v90 = vld [vmem:[#allocation2 + $0x28] sm:$0xf]
    %v91 = vld [vmem:[#allocation2 + $0x2c] sm:$0xf]
    %v92 = vld [vmem:[#allocation2 + $0x30] sm:$0xf]
    %v93 = vld [vmem:[#allocation2 + $0x34] sm:$0xf]
    %v94 = vld [vmem:[#allocation2 + $0x38] sm:$0xf]
    %v95 = vld [vmem:[#allocation2 + $0x3c] sm:$0xf]
    %v96 = vld [vmem:[#allocation2 + $0x40] sm:$0xf]
    %v97 = vld [vmem:[#allocation2 + $0x44] sm:$0xf]
    %v98 = vld [vmem:[#allocation2 + $0x48] sm:$0xf]
    %v99 = vld [vmem:[#allocation2 + $0x4c] sm:$0xf]
    %v100 = vld [vmem:[#allocation2 + $0x50] sm:$0xf]
    %v101 = vld [vmem:[#allocation2 + $0x54] sm:$0xf]
    %v102 = vld [vmem:[#allocation2 + $0x58] sm:$0xf]
    %v103 = vld [vmem:[#allocation2 + $0x5c] sm:$0xf]
    %v104 = vld [vmem:[#allocation2 + $0x60] sm:$0xf]
    %v105 = vld [vmem:[#allocation2 + $0x64] sm:$0xf]
    %v106 = vld [vmem:[#allocation2 + $0x68] sm:$0xf]
    %v107 = vld [vmem:[#allocation2 + $0x6c] sm:$0xf]
    %v108 = vld [vmem:[#allocation2 + $0x70] sm:$0xf]
    %v109 = vld [vmem:[#allocation2 + $0x74] sm:$0xf]
    %v110 = vld [vmem:[#allocation2 + $0x78] sm:$0xf]
    %v111 = vld [vmem:[#allocation2 + $0x7c] sm:$0xf]
    %v112 = vld [vmem:[#allocation5] sm:$0xf]
    %v113 = vld [vmem:[#allocation5 + $0x4] sm:$0xf]
    %v114 = vld [vmem:[#allocation5 + $0x8] sm:$0xf]
    %v115 = vld [vmem:[#allocation5 + $0xc] sm:$0xf]
    %v116 = vld [vmem:[#allocation5 + $0x10] sm:$0xf]
    %v117 = vld [vmem:[#allocation5 + $0x14] sm:$0xf]
    %v118 = vld [vmem:[#allocation5 + $0x18] sm:$0xf]
    %v119 = vld [vmem:[#allocation5 + $0x1c] sm:$0xf]
    %v120 = vld [vmem:[#allocation5 + $0x20] sm:$0xf]
    %v121 = vld [vmem:[#allocation5 + $0x24] sm:$0xf]
    %v122 = vld [vmem:[#allocation5 + $0x28] sm:$0xf]
    %v123 = vld [vmem:[#allocation5 + $0x2c] sm:$0xf]
    %v124 = vld [vmem:[#allocation5 + $0x30] sm:$0xf]
    %v125 = vld [vmem:[#allocation5 + $0x34] sm:$0xf]
    %v126 = vld [vmem:[#allocation5 + $0x38] sm:$0xf]
    %v127 = vld [vmem:[#allocation5 + $0x3c] sm:$0xf]
    %v128 = vld [vmem:[%s2] sm:$0x1]
    %v130 = vlaneseq
    %v131 = vshrl.u32 %v130, 7
    %v132 = vsub.s32 0, %v131
    %v133 = vrot.slane %v128, %v132
    %v167 = vunpack.c.l.b16 %v80
    %v168 = vunpack.c.l.b16 %v81
    %v169 = vunpack.c.l.b16 %v82
    %v170 = vunpack.c.l.b16 %v83
    %v171 = vunpack.c.l.b16 %v84
    %v172 = vunpack.c.l.b16 %v85
    %v173 = vunpack.c.l.b16 %v86
    %v174 = vunpack.c.l.b16 %v87
    %v175 = vunpack.c.l.b16 %v88
    %v176 = vunpack.c.l.b16 %v89
    %v177 = vunpack.c.l.b16 %v90
    %v178 = vunpack.c.l.b16 %v91
    %v179 = vunpack.c.l.b16 %v92
    %v180 = vunpack.c.l.b16 %v93
    %v181 = vunpack.c.l.b16 %v94
    %v182 = vunpack.c.l.b16 %v95
    %v183 = vunpack.c.l.b16 %v96
    %v184 = vunpack.c.l.b16 %v97
    %v185 = vunpack.c.l.b16 %v98
    %v186 = vunpack.c.l.b16 %v99
    %v187 = vunpack.c.l.b16 %v100
    %v188 = vunpack.c.l.b16 %v101
    %v189 = vunpack.c.l.b16 %v102
    %v190 = vunpack.c.l.b16 %v103
    %v191 = vunpack.c.l.b16 %v104
    %v192 = vunpack.c.l.b16 %v105
    %v193 = vunpack.c.l.b16 %v106
    %v194 = vunpack.c.l.b16 %v107
    %v195 = vunpack.c.l.b16 %v108
    %v196 = vunpack.c.l.b16 %v109
    %v197 = vunpack.c.l.b16 %v110
    %v198 = vunpack.c.l.b16 %v111
    %v199 = vpack.c.b16 %v168, %v167
    %v200 = vpack.c.b16 %v170, %v169
    %v201 = vpack.c.b16 %v172, %v171
    %v202 = vpack.c.b16 %v174, %v173
    %v203 = vpack.c.b16 %v176, %v175
    %v204 = vpack.c.b16 %v178, %v177
    %v205 = vpack.c.b16 %v180, %v179
    %v206 = vpack.c.b16 %v182, %v181
    %v207 = vpack.c.b16 %v184, %v183
    %v208 = vpack.c.b16 %v186, %v185
    %v209 = vpack.c.b16 %v188, %v187
    %v210 = vpack.c.b16 %v190, %v189
    %v211 = vpack.c.b16 %v192, %v191
    %v212 = vpack.c.b16 %v194, %v193
    %v213 = vpack.c.b16 %v196, %v195
    %v214 = vpack.c.b16 %v198, %v197
    %v247 = vunpack.c.l.b16 %v112
    %v248 = vunpack.c.l.b16 %v113
    %v249 = vunpack.c.l.b16 %v114
    %v250 = vunpack.c.l.b16 %v115
    %v251 = vunpack.c.l.b16 %v116
    %v252 = vunpack.c.l.b16 %v117
    %v253 = vunpack.c.l.b16 %v118
    %v254 = vunpack.c.l.b16 %v119
    %v255 = vunpack.c.l.b16 %v120
    %v256 = vunpack.c.l.b16 %v121
    %v257 = vunpack.c.l.b16 %v122
    %v258 = vunpack.c.l.b16 %v123
    %v259 = vunpack.c.l.b16 %v124
    %v260 = vunpack.c.l.b16 %v125
    %v261 = vunpack.c.l.b16 %v126
    %v262 = vunpack.c.l.b16 %v127
    %v263 = vpack.c.b16 %v248, %v247
    %v264 = vpack.c.b16 %v250, %v249
    %v265 = vpack.c.b16 %v252, %v251
    %v266 = vpack.c.b16 %v254, %v253
    %v267 = vpack.c.b16 %v256, %v255
    %v268 = vpack.c.b16 %v258, %v257
    %v269 = vpack.c.b16 %v260, %v259
    %v270 = vpack.c.b16 %v262, %v261
    %279 = vmatprep.subr.bf16.mxu0 0
    %280 = vmatpush1.bf16.msra.mxu0 %v263
    %281 = vmatprep.subr.bf16.mxu0 0
    %282 = vmatpush1.bf16.msra.mxu0 %v264
    %283 = vmatprep.subr.bf16.mxu0 0
    %284 = vmatpush1.bf16.msra.mxu0 %v265
    %285 = vmatprep.subr.bf16.mxu0 0
    %286 = vmatpush1.bf16.msra.mxu0 %v266
    %287 = vmatprep.subr.bf16.mxu0 0
    %288 = vmatpush1.bf16.msra.mxu0 %v267
    %289 = vmatprep.subr.bf16.mxu0 0
    %290 = vmatpush1.bf16.msra.mxu0 %v268
    %291 = vmatprep.subr.bf16.mxu0 0
    %292 = vmatpush1.bf16.msra.mxu0 %v269
    %293 = vmatprep.subr.bf16.mxu0 0
    %294 = vmatpush1.bf16.msra.mxu0 %v270
    %295 = vmatprep.subr.bf16.mxu0 0
    %296 = vmatpush1.bf16.msra.mxu0 0
    %297 = vmatprep.subr.bf16.mxu0 0
    %298 = vmatpush1.bf16.msra.mxu0 0
    %299 = vmatprep.subr.bf16.mxu0 0
    %300 = vmatpush1.bf16.msra.mxu0 0
    %301 = vmatprep.subr.bf16.mxu0 0
    %302 = vmatpush1.bf16.msra.mxu0 0
    %303 = vmatprep.subr.bf16.mxu0 0
    %304 = vmatpush1.bf16.msra.mxu0 0
    %305 = vmatprep.subr.bf16.mxu0 0
    %306 = vmatpush1.bf16.msra.mxu0 0
    %307 = vmatprep.subr.bf16.mxu0 0
    %308 = vmatpush1.bf16.msra.mxu0 0
    %309 = vmatprep.subr.bf16.mxu0 0
    %310 = vmatpush1.bf16.msra.mxu0 0
    %311 = vmatprep.mubr.bf16.mxu0 0
    %312 = vmatmul.mubr.bf16.gmra.mrb[0].mxu0 %v199
    %v313 = vpop.f32.mrb[0].mxu0
    %v314 = vadd.f32 %v133, %v313
    %v315 = vpop.f32.mrb[0].mxu0
    %v316 = vpop.f32.mrb[0].mxu0
    %v317 = vadd.f32 %v133, %v316
    %v318 = vpop.f32.mrb[0].mxu0
    %319 = vmatprep.mubr.bf16.mxu0 0
    %320 = vmatmul.mubr.bf16.gmra.mrb[0].mxu0 %v200
    %v321 = vpop.f32.mrb[0].mxu0
    %v322 = vadd.f32 %v133, %v321
    %v323 = vpop.f32.mrb[0].mxu0
    %v324 = vpop.f32.mrb[0].mxu0
    %v325 = vadd.f32 %v133, %v324
    %v326 = vpop.f32.mrb[0].mxu0
    %327 = vmatprep.mubr.bf16.mxu0 0
    %328 = vmatmul.mubr.bf16.gmra.mrb[0].mxu0 %v201
    %v329 = vpop.f32.mrb[0].mxu0
    %v330 = vadd.f32 %v133, %v329
    %v331 = vpop.f32.mrb[0].mxu0
    %v332 = vpop.f32.mrb[0].mxu0
    %v333 = vadd.f32 %v133, %v332
    %v334 = vpop.f32.mrb[0].mxu0
    %335 = vmatprep.mubr.bf16.mxu0 0
    %336 = vmatmul.mubr.bf16.gmra.mrb[0].mxu0 %v202
    %v337 = vpop.f32.mrb[0].mxu0
    %v338 = vadd.f32 %v133, %v337
    %v339 = vpop.f32.mrb[0].mxu0
    %v340 = vpop.f32.mrb[0].mxu0
    %v341 = vadd.f32 %v133, %v340
    %v342 = vpop.f32.mrb[0].mxu0
    %343 = vmatprep.mubr.bf16.mxu0 0
    %344 = vmatmul.mubr.bf16.gmra.mrb[0].mxu0 %v203
    %v345 = vpop.f32.mrb[0].mxu0
    %v346 = vadd.f32 %v133, %v345
    %v347 = vpop.f32.mrb[0].mxu0
    %v348 = vpop.f32.mrb[0].mxu0
    %v349 = vadd.f32 %v133, %v348
    %v350 = vpop.f32.mrb[0].mxu0
    %351 = vmatprep.mubr.bf16.mxu0 0
    %352 = vmatmul.mubr.bf16.gmra.mrb[0].mxu0 %v204
    %v353 = vpop.f32.mrb[0].mxu0
    %v354 = vadd.f32 %v133, %v353
    %v355 = vpop.f32.mrb[0].mxu0
    %v356 = vpop.f32.mrb[0].mxu0
    %v357 = vadd.f32 %v133, %v356
    %v358 = vpop.f32.mrb[0].mxu0
    %359 = vmatprep.mubr.bf16.mxu0 0
    %360 = vmatmul.mubr.bf16.gmra.mrb[0].mxu0 %v205
    %v361 = vpop.f32.mrb[0].mxu0
    %v362 = vadd.f32 %v133, %v361
    %v363 = vpop.f32.mrb[0].mxu0
    %v364 = vpop.f32.mrb[0].mxu0
    %v365 = vadd.f32 %v133, %v364
    %v366 = vpop.f32.mrb[0].mxu0
    %367 = vmatprep.mubr.bf16.mxu0 0
    %368 = vmatmul.mubr.bf16.gmra.mrb[0].mxu0 %v206
    %v369 = vpop.f32.mrb[0].mxu0
    %v370 = vadd.f32 %v133, %v369
    %v371 = vpop.f32.mrb[0].mxu0
    %v372 = vpop.f32.mrb[0].mxu0
    %v373 = vadd.f32 %v133, %v372
    %v374 = vpop.f32.mrb[0].mxu0
    %375 = vmatprep.mubr.bf16.mxu0 0
    %376 = vmatmul.mubr.bf16.gmra.mrb[0].mxu0 %v207
    %v377 = vpop.f32.mrb[0].mxu0
    %v378 = vadd.f32 %v133, %v377
    %v379 = vpop.f32.mrb[0].mxu0
    %v380 = vpop.f32.mrb[0].mxu0
    %v381 = vadd.f32 %v133, %v380
    %v382 = vpop.f32.mrb[0].mxu0
    %383 = vmatprep.mubr.bf16.mxu0 0
    %384 = vmatmul.mubr.bf16.gmra.mrb[0].mxu0 %v208
    %v385 = vpop.f32.mrb[0].mxu0
    %v386 = vadd.f32 %v133, %v385
    %v387 = vpop.f32.mrb[0].mxu0
    %v388 = vpop.f32.mrb[0].mxu0
    %v389 = vadd.f32 %v133, %v388
    %v390 = vpop.f32.mrb[0].mxu0
    %391 = vmatprep.mubr.bf16.mxu0 0
    %392 = vmatmul.mubr.bf16.gmra.mrb[0].mxu0 %v209
    %v393 = vpop.f32.mrb[0].mxu0
    %v394 = vadd.f32 %v133, %v393
    %v395 = vpop.f32.mrb[0].mxu0
    %v396 = vpop.f32.mrb[0].mxu0
    %v397 = vadd.f32 %v133, %v396
    %v398 = vpop.f32.mrb[0].mxu0
    %399 = vmatprep.mubr.bf16.mxu0 0
    %400 = vmatmul.mubr.bf16.gmra.mrb[0].mxu0 %v210
    %v401 = vpop.f32.mrb[0].mxu0
    %v402 = vadd.f32 %v133, %v401
    %v403 = vpop.f32.mrb[0].mxu0
    %v404 = vpop.f32.mrb[0].mxu0
    %v405 = vadd.f32 %v133, %v404
    %v406 = vpop.f32.mrb[0].mxu0
    %407 = vmatprep.mubr.bf16.mxu0 0
    %408 = vmatmul.mubr.bf16.gmra.mrb[0].mxu0 %v211
    %v409 = vpop.f32.mrb[0].mxu0
    %v410 = vadd.f32 %v133, %v409
    %v411 = vpop.f32.mrb[0].mxu0
    %v412 = vpop.f32.mrb[0].mxu0
    %v413 = vadd.f32 %v133, %v412
    %v414 = vpop.f32.mrb[0].mxu0
    %415 = vmatprep.mubr.bf16.mxu0 0
    %416 = vmatmul.mubr.bf16.gmra.mrb[0].mxu0 %v212
    %v417 = vpop.f32.mrb[0].mxu0
    %v418 = vadd.f32 %v133, %v417
    %v419 = vpop.f32.mrb[0].mxu0
    %v420 = vpop.f32.mrb[0].mxu0
    %v421 = vadd.f32 %v133, %v420
    %v422 = vpop.f32.mrb[0].mxu0
    %423 = vmatprep.mubr.bf16.mxu0 0
    %424 = vmatmul.mubr.bf16.gmra.mrb[0].mxu0 %v213
    %v425 = vpop.f32.mrb[0].mxu0
    %v426 = vadd.f32 %v133, %v425
    %v427 = vpop.f32.mrb[0].mxu0
    %v428 = vpop.f32.mrb[0].mxu0
    %v429 = vadd.f32 %v133, %v428
    %v430 = vpop.f32.mrb[0].mxu0
    %431 = vmatprep.mubr.bf16.mxu0 0
    %432 = vmatmul.mubr.bf16.gmra.mrb[0].mxu0 %v214
    %v433 = vpop.f32.mrb[0].mxu0
    %v434 = vadd.f32 %v133, %v433
    %v435 = vpop.f32.mrb[0].mxu0
    %v436 = vpop.f32.mrb[0].mxu0
    %v437 = vadd.f32 %v133, %v436
    %v438 = vpop.f32.mrb[0].mxu0
    %439 = vdwg.mxu0
    %v440 = vld [vmem:[#allocation7] sm:$0xf]
    %v441 = vld [vmem:[#allocation7 + $0x4] sm:$0xf]
    %v442 = vld [vmem:[#allocation7 + $0x8] sm:$0xf]
    %v443 = vld [vmem:[#allocation7 + $0xc] sm:$0xf]
    %v444 = vld [vmem:[#allocation7 + $0x10] sm:$0xf]
    %v445 = vld [vmem:[#allocation7 + $0x14] sm:$0xf]
    %v446 = vld [vmem:[#allocation7 + $0x18] sm:$0xf]
    %v447 = vld [vmem:[#allocation7 + $0x1c] sm:$0xf]
    %v448 = vld [vmem:[#allocation7 + $0x20] sm:$0xf]
    %v449 = vld [vmem:[#allocation7 + $0x24] sm:$0xf]
    %v450 = vld [vmem:[#allocation7 + $0x28] sm:$0xf]
    %v451 = vld [vmem:[#allocation7 + $0x2c] sm:$0xf]
    %v452 = vld [vmem:[#allocation7 + $0x30] sm:$0xf]
    %v453 = vld [vmem:[#allocation7 + $0x34] sm:$0xf]
    %v454 = vld [vmem:[#allocation7 + $0x38] sm:$0xf]
    %v455 = vld [vmem:[#allocation7 + $0x3c] sm:$0xf]
    %v456 = vld [vmem:[#allocation7 + $0x40] sm:$0xf]
    %v457 = vld [vmem:[#allocation7 + $0x44] sm:$0xf]
    %v458 = vld [vmem:[#allocation7 + $0x48] sm:$0xf]
    %v459 = vld [vmem:[#allocation7 + $0x4c] sm:$0xf]
    %v460 = vld [vmem:[#allocation7 + $0x50] sm:$0xf]
    %v461 = vld [vmem:[#allocation7 + $0x54] sm:$0xf]
    %v462 = vld [vmem:[#allocation7 + $0x58] sm:$0xf]
    %v463 = vld [vmem:[#allocation7 + $0x5c] sm:$0xf]
    %v464 = vld [vmem:[#allocation7 + $0x60] sm:$0xf]
    %v465 = vld [vmem:[#allocation7 + $0x64] sm:$0xf]
    %v466 = vld [vmem:[#allocation7 + $0x68] sm:$0xf]
    %v467 = vld [vmem:[#allocation7 + $0x6c] sm:$0xf]
    %v468 = vld [vmem:[#allocation7 + $0x70] sm:$0xf]
    %v469 = vld [vmem:[#allocation7 + $0x74] sm:$0xf]
    %v470 = vld [vmem:[#allocation7 + $0x78] sm:$0xf]
    %v471 = vld [vmem:[#allocation7 + $0x7c] sm:$0xf]
    %v472 = vld [vmem:[#allocation8] sm:$0xf]
    %v473 = vld [vmem:[#allocation8 + $0x4] sm:$0xf]
    %v474 = vld [vmem:[#allocation8 + $0x8] sm:$0xf]
    %v475 = vld [vmem:[#allocation8 + $0xc] sm:$0xf]
    %v476 = vld [vmem:[#allocation8 + $0x10] sm:$0xf]
    %v477 = vld [vmem:[#allocation8 + $0x14] sm:$0xf]
    %v478 = vld [vmem:[#allocation8 + $0x18] sm:$0xf]
    %v479 = vld [vmem:[#allocation8 + $0x1c] sm:$0xf]
    %v480 = vld [vmem:[#allocation8 + $0x20] sm:$0xf]
    %v481 = vld [vmem:[#allocation8 + $0x24] sm:$0xf]
    %v482 = vld [vmem:[#allocation8 + $0x28] sm:$0xf]
    %v483 = vld [vmem:[#allocation8 + $0x2c] sm:$0xf]
    %v484 = vld [vmem:[#allocation8 + $0x30] sm:$0xf]
    %v485 = vld [vmem:[#allocation8 + $0x34] sm:$0xf]
    %v486 = vld [vmem:[#allocation8 + $0x38] sm:$0xf]
    %v487 = vld [vmem:[#allocation8 + $0x3c] sm:$0xf]
    %v488 = vld [vmem:[%s5] sm:$0x1]
    %v490 = vlaneseq
    %v491 = vshrl.u32 %v490, 7
    %v492 = vsub.s32 0, %v491
    %v493 = vrot.slane %v488, %v492
    %v527 = vunpack.c.l.b16 %v440
    %v528 = vunpack.c.l.b16 %v441
    %v529 = vunpack.c.l.b16 %v442
    %v530 = vunpack.c.l.b16 %v443
    %v531 = vunpack.c.l.b16 %v444
    %v532 = vunpack.c.l.b16 %v445
    %v533 = vunpack.c.l.b16 %v446
    %v534 = vunpack.c.l.b16 %v447
    %v535 = vunpack.c.l.b16 %v448
    %v536 = vunpack.c.l.b16 %v449
    %v537 = vunpack.c.l.b16 %v450
    %v538 = vunpack.c.l.b16 %v451
    %v539 = vunpack.c.l.b16 %v452
    %v540 = vunpack.c.l.b16 %v453
    %v541 = vunpack.c.l.b16 %v454
    %v542 = vunpack.c.l.b16 %v455
    %v543 = vunpack.c.l.b16 %v456
    %v544 = vunpack.c.l.b16 %v457
    %v545 = vunpack.c.l.b16 %v458
    %v546 = vunpack.c.l.b16 %v459
    %v547 = vunpack.c.l.b16 %v460
    %v548 = vunpack.c.l.b16 %v461
    %v549 = vunpack.c.l.b16 %v462
    %v550 = vunpack.c.l.b16 %v463
    %v551 = vunpack.c.l.b16 %v464
    %v552 = vunpack.c.l.b16 %v465
    %v553 = vunpack.c.l.b16 %v466
    %v554 = vunpack.c.l.b16 %v467
    %v555 = vunpack.c.l.b16 %v468
    %v556 = vunpack.c.l.b16 %v469
    %v557 = vunpack.c.l.b16 %v470
    %v558 = vunpack.c.l.b16 %v471
    %v559 = vpack.c.b16 %v528, %v527
    %v560 = vpack.c.b16 %v530, %v529
    %v561 = vpack.c.b16 %v532, %v531
    %v562 = vpack.c.b16 %v534, %v533
    %v563 = vpack.c.b16 %v536, %v535
    %v564 = vpack.c.b16 %v538, %v537
    %v565 = vpack.c.b16 %v540, %v539
    %v566 = vpack.c.b16 %v542, %v541
    %v567 = vpack.c.b16 %v544, %v543
    %v568 = vpack.c.b16 %v546, %v545
    %v569 = vpack.c.b16 %v548, %v547
    %v570 = vpack.c.b16 %v550, %v549
    %v571 = vpack.c.b16 %v552, %v551
    %v572 = vpack.c.b16 %v554, %v553
    %v573 = vpack.c.b16 %v556, %v555
    %v574 = vpack.c.b16 %v558, %v557
    %v607 = vunpack.c.l.b16 %v472
    %v608 = vunpack.c.l.b16 %v473
    %v609 = vunpack.c.l.b16 %v474
    %v610 = vunpack.c.l.b16 %v475
    %v611 = vunpack.c.l.b16 %v476
    %v612 = vunpack.c.l.b16 %v477
    %v613 = vunpack.c.l.b16 %v478
    %v614 = vunpack.c.l.b16 %v479
    %v615 = vunpack.c.l.b16 %v480
    %v616 = vunpack.c.l.b16 %v481
    %v617 = vunpack.c.l.b16 %v482
    %v618 = vunpack.c.l.b16 %v483
    %v619 = vunpack.c.l.b16 %v484
    %v620 = vunpack.c.l.b16 %v485
    %v621 = vunpack.c.l.b16 %v486
    %v622 = vunpack.c.l.b16 %v487
    %v623 = vpack.c.b16 %v608, %v607
    %v624 = vpack.c.b16 %v610, %v609
    %v625 = vpack.c.b16 %v612, %v611
    %v626 = vpack.c.b16 %v614, %v613
    %v627 = vpack.c.b16 %v616, %v615
    %v628 = vpack.c.b16 %v618, %v617
    %v629 = vpack.c.b16 %v620, %v619
    %v630 = vpack.c.b16 %v622, %v621
    %639 = vmatprep.subr.bf16.mxu0 0
    %640 = vmatpush1.bf16.msra.mxu0 %v623
    %641 = vmatprep.subr.bf16.mxu0 0
    %642 = vmatpush1.bf16.msra.mxu0 %v624
    %643 = vmatprep.subr.bf16.mxu0 0
    %644 = vmatpush1.bf16.msra.mxu0 %v625
    %645 = vmatprep.subr.bf16.mxu0 0
    %646 = vmatpush1.bf16.msra.mxu0 %v626
    %647 = vmatprep.subr.bf16.mxu0 0
    %648 = vmatpush1.bf16.msra.mxu0 %v627
    %649 = vmatprep.subr.bf16.mxu0 0
    %650 = vmatpush1.bf16.msra.mxu0 %v628
    %651 = vmatprep.subr.bf16.mxu0 0
    %652 = vmatpush1.bf16.msra.mxu0 %v629
    %653 = vmatprep.subr.bf16.mxu0 0
    %654 = vmatpush1.bf16.msra.mxu0 %v630
    %655 = vmatprep.subr.bf16.mxu0 0
    %656 = vmatpush1.bf16.msra.mxu0 0
    %657 = vmatprep.subr.bf16.mxu0 0
    %658 = vmatpush1.bf16.msra.mxu0 0
    %659 = vmatprep.subr.bf16.mxu0 0
    %660 = vmatpush1.bf16.msra.mxu0 0
    %661 = vmatprep.subr.bf16.mxu0 0
    %662 = vmatpush1.bf16.msra.mxu0 0
    %663 = vmatprep.subr.bf16.mxu0 0
    %664 = vmatpush1.bf16.msra.mxu0 0
    %665 = vmatprep.subr.bf16.mxu0 0
    %666 = vmatpush1.bf16.msra.mxu0 0
    %667 = vmatprep.subr.bf16.mxu0 0
    %668 = vmatpush1.bf16.msra.mxu0 0
    %669 = vmatprep.subr.bf16.mxu0 0
    %670 = vmatpush1.bf16.msra.mxu0 0
    %671 = vmatprep.mubr.bf16.mxu0 0
    %672 = vmatmul.mubr.bf16.gmra.mrb[0].mxu0 %v559
    %v673 = vpop.f32.mrb[0].mxu0
    %v674 = vadd.f32 %v493, %v673
    %v675 = vpop.f32.mrb[0].mxu0
    %v676 = vpop.f32.mrb[0].mxu0
    %v677 = vadd.f32 %v493, %v676
    %v678 = vpop.f32.mrb[0].mxu0
    %679 = vmatprep.mubr.bf16.mxu0 0
    %680 = vmatmul.mubr.bf16.gmra.mrb[0].mxu0 %v560
    %v681 = vpop.f32.mrb[0].mxu0
    %v682 = vadd.f32 %v493, %v681
    %v683 = vpop.f32.mrb[0].mxu0
    %v684 = vpop.f32.mrb[0].mxu0
    %v685 = vadd.f32 %v493, %v684
    %v686 = vpop.f32.mrb[0].mxu0
    %687 = vmatprep.mubr.bf16.mxu0 0
    %688 = vmatmul.mubr.bf16.gmra.mrb[0].mxu0 %v561
    %v689 = vpop.f32.mrb[0].mxu0
    %v690 = vadd.f32 %v493, %v689
    %v691 = vpop.f32.mrb[0].mxu0
    %v692 = vpop.f32.mrb[0].mxu0
    %v693 = vadd.f32 %v493, %v692
    %v694 = vpop.f32.mrb[0].mxu0
    %695 = vmatprep.mubr.bf16.mxu0 0
    %696 = vmatmul.mubr.bf16.gmra.mrb[0].mxu0 %v562
    %v697 = vpop.f32.mrb[0].mxu0
    %v698 = vadd.f32 %v493, %v697
    %v699 = vpop.f32.mrb[0].mxu0
    %v700 = vpop.f32.mrb[0].mxu0
    %v701 = vadd.f32 %v493, %v700
    %v702 = vpop.f32.mrb[0].mxu0
    %703 = vmatprep.mubr.bf16.mxu0 0
    %704 = vmatmul.mubr.bf16.gmra.mrb[0].mxu0 %v563
    %v705 = vpop.f32.mrb[0].mxu0
    %v706 = vadd.f32 %v493, %v705
    %v707 = vpop.f32.mrb[0].mxu0
    %v708 = vpop.f32.mrb[0].mxu0
    %v709 = vadd.f32 %v493, %v708
    %v710 = vpop.f32.mrb[0].mxu0
    %711 = vmatprep.mubr.bf16.mxu0 0
    %712 = vmatmul.mubr.bf16.gmra.mrb[0].mxu0 %v564
    %v713 = vpop.f32.mrb[0].mxu0
    %v714 = vadd.f32 %v493, %v713
    %v715 = vpop.f32.mrb[0].mxu0
    %v716 = vpop.f32.mrb[0].mxu0
    %v717 = vadd.f32 %v493, %v716
    %v718 = vpop.f32.mrb[0].mxu0
    %719 = vmatprep.mubr.bf16.mxu0 0
    %720 = vmatmul.mubr.bf16.gmra.mrb[0].mxu0 %v565
    %v721 = vpop.f32.mrb[0].mxu0
    %v722 = vadd.f32 %v493, %v721
    %v723 = vpop.f32.mrb[0].mxu0
    %v724 = vpop.f32.mrb[0].mxu0
    %v725 = vadd.f32 %v493, %v724
    %v726 = vpop.f32.mrb[0].mxu0
    %727 = vmatprep.mubr.bf16.mxu0 0
    %728 = vmatmul.mubr.bf16.gmra.mrb[0].mxu0 %v566
    %v729 = vpop.f32.mrb[0].mxu0
    %v730 = vadd.f32 %v493, %v729
    %v731 = vpop.f32.mrb[0].mxu0
    %v732 = vpop.f32.mrb[0].mxu0
    %v733 = vadd.f32 %v493, %v732
    %v734 = vpop.f32.mrb[0].mxu0
    %735 = vmatprep.mubr.bf16.mxu0 0
    %736 = vmatmul.mubr.bf16.gmra.mrb[0].mxu0 %v567
    %v737 = vpop.f32.mrb[0].mxu0
    %v738 = vadd.f32 %v493, %v737
    %v739 = vpop.f32.mrb[0].mxu0
    %v740 = vpop.f32.mrb[0].mxu0
    %v741 = vadd.f32 %v493, %v740
    %v742 = vpop.f32.mrb[0].mxu0
    %743 = vmatprep.mubr.bf16.mxu0 0
    %744 = vmatmul.mubr.bf16.gmra.mrb[0].mxu0 %v568
    %v745 = vpop.f32.mrb[0].mxu0
    %v746 = vadd.f32 %v493, %v745
    %v747 = vpop.f32.mrb[0].mxu0
    %v748 = vpop.f32.mrb[0].mxu0
    %v749 = vadd.f32 %v493, %v748
    %v750 = vpop.f32.mrb[0].mxu0
    %751 = vmatprep.mubr.bf16.mxu0 0
    %752 = vmatmul.mubr.bf16.gmra.mrb[0].mxu0 %v569
    %v753 = vpop.f32.mrb[0].mxu0
    %v754 = vadd.f32 %v493, %v753
    %v755 = vpop.f32.mrb[0].mxu0
    %v756 = vpop.f32.mrb[0].mxu0
    %v757 = vadd.f32 %v493, %v756
    %v758 = vpop.f32.mrb[0].mxu0
    %759 = vmatprep.mubr.bf16.mxu0 0
    %760 = vmatmul.mubr.bf16.gmra.mrb[0].mxu0 %v570
    %v761 = vpop.f32.mrb[0].mxu0
    %v762 = vadd.f32 %v493, %v761
    %v763 = vpop.f32.mrb[0].mxu0
    %v764 = vpop.f32.mrb[0].mxu0
    %v765 = vadd.f32 %v493, %v764
    %v766 = vpop.f32.mrb[0].mxu0
    %767 = vmatprep.mubr.bf16.mxu0 0
    %768 = vmatmul.mubr.bf16.gmra.mrb[0].mxu0 %v571
    %v769 = vpop.f32.mrb[0].mxu0
    %v770 = vadd.f32 %v493, %v769
    %v771 = vpop.f32.mrb[0].mxu0
    %v772 = vpop.f32.mrb[0].mxu0
    %v773 = vadd.f32 %v493, %v772
    %v774 = vpop.f32.mrb[0].mxu0
    %775 = vmatprep.mubr.bf16.mxu0 0
    %776 = vmatmul.mubr.bf16.gmra.mrb[0].mxu0 %v572
    %v777 = vpop.f32.mrb[0].mxu0
    %v778 = vadd.f32 %v493, %v777
    %v779 = vpop.f32.mrb[0].mxu0
    %v780 = vpop.f32.mrb[0].mxu0
    %v781 = vadd.f32 %v493, %v780
    %v782 = vpop.f32.mrb[0].mxu0
    %783 = vmatprep.mubr.bf16.mxu0 0
    %784 = vmatmul.mubr.bf16.gmra.mrb[0].mxu0 %v573
    %v785 = vpop.f32.mrb[0].mxu0
    %v786 = vadd.f32 %v493, %v785
    %v787 = vpop.f32.mrb[0].mxu0
    %v788 = vpop.f32.mrb[0].mxu0
    %v789 = vadd.f32 %v493, %v788
    %v790 = vpop.f32.mrb[0].mxu0
    %791 = vmatprep.mubr.bf16.mxu0 0
    %792 = vmatmul.mubr.bf16.gmra.mrb[0].mxu0 %v574
    %v793 = vpop.f32.mrb[0].mxu0
    %v794 = vadd.f32 %v493, %v793
    %v795 = vpop.f32.mrb[0].mxu0
    %v796 = vpop.f32.mrb[0].mxu0
    %v797 = vadd.f32 %v493, %v796
    %v798 = vpop.f32.mrb[0].mxu0
    %799 = vdwg.mxu0
    %v800 = vpack.c.bf16 %v317, %v314
    %v801 = vpack.c.bf16 %v325, %v322
    %v802 = vpack.c.bf16 %v333, %v330
    %v803 = vpack.c.bf16 %v341, %v338
    %v804 = vpack.c.bf16 %v349, %v346
    %v805 = vpack.c.bf16 %v357, %v354
    %v806 = vpack.c.bf16 %v365, %v362
    %v807 = vpack.c.bf16 %v373, %v370
    %v808 = vpack.c.bf16 %v381, %v378
    %v809 = vpack.c.bf16 %v389, %v386
    %v810 = vpack.c.bf16 %v397, %v394
    %v811 = vpack.c.bf16 %v405, %v402
    %v812 = vpack.c.bf16 %v413, %v410
    %v813 = vpack.c.bf16 %v421, %v418
    %v814 = vpack.c.bf16 %v429, %v426
    %v815 = vpack.c.bf16 %v437, %v434
    %v832 = vunpack.c.l.b16 %v800
    %v833 = vunpack.c.h.b16 %v800
    %v834 = vunpack.c.l.b16 %v801
    %v835 = vunpack.c.h.b16 %v801
    %v836 = vunpack.c.l.b16 %v802
    %v837 = vunpack.c.h.b16 %v802
    %v838 = vunpack.c.l.b16 %v803
    %v839 = vunpack.c.h.b16 %v803
    %v840 = vunpack.c.l.b16 %v804
    %v841 = vunpack.c.h.b16 %v804
    %v842 = vunpack.c.l.b16 %v805
    %v843 = vunpack.c.h.b16 %v805
    %v844 = vunpack.c.l.b16 %v806
    %v845 = vunpack.c.h.b16 %v806
    %v846 = vunpack.c.l.b16 %v807
    %v847 = vunpack.c.h.b16 %v807
    %v848 = vunpack.c.l.b16 %v808
    %v849 = vunpack.c.h.b16 %v808
    %v850 = vunpack.c.l.b16 %v809
    %v851 = vunpack.c.h.b16 %v809
    %v852 = vunpack.c.l.b16 %v810
    %v853 = vunpack.c.h.b16 %v810
    %v854 = vunpack.c.l.b16 %v811
    %v855 = vunpack.c.h.b16 %v811
    %v856 = vunpack.c.l.b16 %v812
    %v857 = vunpack.c.h.b16 %v812
    %v858 = vunpack.c.l.b16 %v813
    %v859 = vunpack.c.h.b16 %v813
    %v860 = vunpack.c.l.b16 %v814
    %v861 = vunpack.c.h.b16 %v814
    %v862 = vunpack.c.l.b16 %v815
    %v863 = vunpack.c.h.b16 %v815
    %v864 = vpack.c.b16 %v832, %v832
    %v865 = vpack.c.b16 %v833, %v833
    %v866 = vpack.c.b16 %v834, %v834
    %v867 = vpack.c.b16 %v835, %v835
    %v868 = vpack.c.b16 %v836, %v836
    %v869 = vpack.c.b16 %v837, %v837
    %v870 = vpack.c.b16 %v838, %v838
    %v871 = vpack.c.b16 %v839, %v839
    %v872 = vpack.c.b16 %v840, %v840
    %v873 = vpack.c.b16 %v841, %v841
    %v874 = vpack.c.b16 %v842, %v842
    %v875 = vpack.c.b16 %v843, %v843
    %v876 = vpack.c.b16 %v844, %v844
    %v877 = vpack.c.b16 %v845, %v845
    %v878 = vpack.c.b16 %v846, %v846
    %v879 = vpack.c.b16 %v847, %v847
    %v880 = vpack.c.b16 %v848, %v848
    %v881 = vpack.c.b16 %v849, %v849
    %v882 = vpack.c.b16 %v850, %v850
    %v883 = vpack.c.b16 %v851, %v851
    %v884 = vpack.c.b16 %v852, %v852
    %v885 = vpack.c.b16 %v853, %v853
    %v886 = vpack.c.b16 %v854, %v854
    %v887 = vpack.c.b16 %v855, %v855
    %v888 = vpack.c.b16 %v856, %v856
    %v889 = vpack.c.b16 %v857, %v857
    %v890 = vpack.c.b16 %v858, %v858
    %v891 = vpack.c.b16 %v859, %v859
    %v892 = vpack.c.b16 %v860, %v860
    %v893 = vpack.c.b16 %v861, %v861
    %v894 = vpack.c.b16 %v862, %v862
    %v895 = vpack.c.b16 %v863, %v863
    %928 = vst [vmem:[#allocation10] sm:$0xf] %v864
    %929 = vst [vmem:[#allocation10 + $0x8] sm:$0xf] %v865
    %930 = vst [vmem:[#allocation10 + $0x10] sm:$0xf] %v866
    %931 = vst [vmem:[#allocation10 + $0x18] sm:$0xf] %v867
    %932 = vst [vmem:[#allocation10 + $0x20] sm:$0xf] %v868
    %933 = vst [vmem:[#allocation10 + $0x28] sm:$0xf] %v869
    %934 = vst [vmem:[#allocation10 + $0x30] sm:$0xf] %v870
    %935 = vst [vmem:[#allocation10 + $0x38] sm:$0xf] %v871
    %936 = vst [vmem:[#allocation10 + $0x40] sm:$0xf] %v872
    %937 = vst [vmem:[#allocation10 + $0x48] sm:$0xf] %v873
    %938 = vst [vmem:[#allocation10 + $0x50] sm:$0xf] %v874
    %939 = vst [vmem:[#allocation10 + $0x58] sm:$0xf] %v875
    %940 = vst [vmem:[#allocation10 + $0x60] sm:$0xf] %v876
    %941 = vst [vmem:[#allocation10 + $0x68] sm:$0xf] %v877
    %942 = vst [vmem:[#allocation10 + $0x70] sm:$0xf] %v878
    %943 = vst [vmem:[#allocation10 + $0x78] sm:$0xf] %v879
    %944 = vst [vmem:[#allocation10 + $0x80] sm:$0xf] %v880
    %945 = vst [vmem:[#allocation10 + $0x88] sm:$0xf] %v881
    %946 = vst [vmem:[#allocation10 + $0x90] sm:$0xf] %v882
    %947 = vst [vmem:[#allocation10 + $0x98] sm:$0xf] %v883
    %948 = vst [vmem:[#allocation10 + $0xa0] sm:$0xf] %v884
    %949 = vst [vmem:[#allocation10 + $0xa8] sm:$0xf] %v885
    %950 = vst [vmem:[#allocation10 + $0xb0] sm:$0xf] %v886
    %951 = vst [vmem:[#allocation10 + $0xb8] sm:$0xf] %v887
    %952 = vst [vmem:[#allocation10 + $0xc0] sm:$0xf] %v888
    %953 = vst [vmem:[#allocation10 + $0xc8] sm:$0xf] %v889
    %954 = vst [vmem:[#allocation10 + $0xd0] sm:$0xf] %v890
    %955 = vst [vmem:[#allocation10 + $0xd8] sm:$0xf] %v891
    %956 = vst [vmem:[#allocation10 + $0xe0] sm:$0xf] %v892
    %957 = vst [vmem:[#allocation10 + $0xe8] sm:$0xf] %v893
    %958 = vst [vmem:[#allocation10 + $0xf0] sm:$0xf] %v894
    %959 = vst [vmem:[#allocation10 + $0xf8] sm:$0xf] %v895
    %v960 = vpack.c.bf16 %v677, %v674
    %v961 = vpack.c.bf16 %v685, %v682
    %v962 = vpack.c.bf16 %v693, %v690
    %v963 = vpack.c.bf16 %v701, %v698
    %v964 = vpack.c.bf16 %v709, %v706
    %v965 = vpack.c.bf16 %v717, %v714
    %v966 = vpack.c.bf16 %v725, %v722
    %v967 = vpack.c.bf16 %v733, %v730
    %v968 = vpack.c.bf16 %v741, %v738
    %v969 = vpack.c.bf16 %v749, %v746
    %v970 = vpack.c.bf16 %v757, %v754
    %v971 = vpack.c.bf16 %v765, %v762
    %v972 = vpack.c.bf16 %v773, %v770
    %v973 = vpack.c.bf16 %v781, %v778
    %v974 = vpack.c.bf16 %v789, %v786
    %v975 = vpack.c.bf16 %v797, %v794
    %v992 = vunpack.c.l.b16 %v960
    %v993 = vunpack.c.h.b16 %v960
    %v994 = vunpack.c.l.b16 %v961
    %v995 = vunpack.c.h.b16 %v961
    %v996 = vunpack.c.l.b16 %v962
    %v997 = vunpack.c.h.b16 %v962
    %v998 = vunpack.c.l.b16 %v963
    %v999 = vunpack.c.h.b16 %v963
    %v1000 = vunpack.c.l.b16 %v964
    %v1001 = vunpack.c.h.b16 %v964
    %v1002 = vunpack.c.l.b16 %v965
    %v1003 = vunpack.c.h.b16 %v965
    %v1004 = vunpack.c.l.b16 %v966
    %v1005 = vunpack.c.h.b16 %v966
    %v1006 = vunpack.c.l.b16 %v967
    %v1007 = vunpack.c.h.b16 %v967
    %v1008 = vunpack.c.l.b16 %v968
    %v1009 = vunpack.c.h.b16 %v968
    %v1010 = vunpack.c.l.b16 %v969
    %v1011 = vunpack.c.h.b16 %v969
    %v1012 = vunpack.c.l.b16 %v970
    %v1013 = vunpack.c.h.b16 %v970
    %v1014 = vunpack.c.l.b16 %v971
    %v1015 = vunpack.c.h.b16 %v971
    %v1016 = vunpack.c.l.b16 %v972
    %v1017 = vunpack.c.h.b16 %v972
    %v1018 = vunpack.c.l.b16 %v973
    %v1019 = vunpack.c.h.b16 %v973
    %v1020 = vunpack.c.l.b16 %v974
    %v1021 = vunpack.c.h.b16 %v974
    %v1022 = vunpack.c.l.b16 %v975
    %v1023 = vunpack.c.h.b16 %v975
    %v1024 = vpack.c.b16 %v992, %v992
    %v1025 = vpack.c.b16 %v993, %v993
    %v1026 = vpack.c.b16 %v994, %v994
    %v1027 = vpack.c.b16 %v995, %v995
    %v1028 = vpack.c.b16 %v996, %v996
    %v1029 = vpack.c.b16 %v997, %v997
    %v1030 = vpack.c.b16 %v998, %v998
    %v1031 = vpack.c.b16 %v999, %v999
    %v1032 = vpack.c.b16 %v1000, %v1000
    %v1033 = vpack.c.b16 %v1001, %v1001
    %v1034 = vpack.c.b16 %v1002, %v1002
    %v1035 = vpack.c.b16 %v1003, %v1003
    %v1036 = vpack.c.b16 %v1004, %v1004
    %v1037 = vpack.c.b16 %v1005, %v1005
    %v1038 = vpack.c.b16 %v1006, %v1006
    %v1039 = vpack.c.b16 %v1007, %v1007
    %v1040 = vpack.c.b16 %v1008, %v1008
    %v1041 = vpack.c.b16 %v1009, %v1009
    %v1042 = vpack.c.b16 %v1010, %v1010
    %v1043 = vpack.c.b16 %v1011, %v1011
    %v1044 = vpack.c.b16 %v1012, %v1012
    %v1045 = vpack.c.b16 %v1013, %v1013
    %v1046 = vpack.c.b16 %v1014, %v1014
    %v1047 = vpack.c.b16 %v1015, %v1015
    %v1048 = vpack.c.b16 %v1016, %v1016
    %v1049 = vpack.c.b16 %v1017, %v1017
    %v1050 = vpack.c.b16 %v1018, %v1018
    %v1051 = vpack.c.b16 %v1019, %v1019
    %v1052 = vpack.c.b16 %v1020, %v1020
    %v1053 = vpack.c.b16 %v1021, %v1021
    %v1054 = vpack.c.b16 %v1022, %v1022
    %v1055 = vpack.c.b16 %v1023, %v1023
    %1088 = vst [vmem:[#allocation10 + $0x4] sm:$0xf] %v1024
    %1089 = vst [vmem:[#allocation10 + $0xc] sm:$0xf] %v1025
    %1090 = vst [vmem:[#allocation10 + $0x14] sm:$0xf] %v1026
    %1091 = vst [vmem:[#allocation10 + $0x1c] sm:$0xf] %v1027
    %1092 = vst [vmem:[#allocation10 + $0x24] sm:$0xf] %v1028
    %1093 = vst [vmem:[#allocation10 + $0x2c] sm:$0xf] %v1029
    %1094 = vst [vmem:[#allocation10 + $0x34] sm:$0xf] %v1030
    %1095 = vst [vmem:[#allocation10 + $0x3c] sm:$0xf] %v1031
    %1096 = vst [vmem:[#allocation10 + $0x44] sm:$0xf] %v1032
    %1097 = vst [vmem:[#allocation10 + $0x4c] sm:$0xf] %v1033
    %1098 = vst [vmem:[#allocation10 + $0x54] sm:$0xf] %v1034
    %1099 = vst [vmem:[#allocation10 + $0x5c] sm:$0xf] %v1035
    %1100 = vst [vmem:[#allocation10 + $0x64] sm:$0xf] %v1036
    %1101 = vst [vmem:[#allocation10 + $0x6c] sm:$0xf] %v1037
    %1102 = vst [vmem:[#allocation10 + $0x74] sm:$0xf] %v1038
    %1103 = vst [vmem:[#allocation10 + $0x7c] sm:$0xf] %v1039
    %1104 = vst [vmem:[#allocation10 + $0x84] sm:$0xf] %v1040
    %1105 = vst [vmem:[#allocation10 + $0x8c] sm:$0xf] %v1041
    %1106 = vst [vmem:[#allocation10 + $0x94] sm:$0xf] %v1042
    %1107 = vst [vmem:[#allocation10 + $0x9c] sm:$0xf] %v1043
    %1108 = vst [vmem:[#allocation10 + $0xa4] sm:$0xf] %v1044
    %1109 = vst [vmem:[#allocation10 + $0xac] sm:$0xf] %v1045
    %1110 = vst [vmem:[#allocation10 + $0xb4] sm:$0xf] %v1046
    %1111 = vst [vmem:[#allocation10 + $0xbc] sm:$0xf] %v1047
    %1112 = vst [vmem:[#allocation10 + $0xc4] sm:$0xf] %v1048
    %1113 = vst [vmem:[#allocation10 + $0xcc] sm:$0xf] %v1049
    %1114 = vst [vmem:[#allocation10 + $0xd4] sm:$0xf] %v1050
    %1115 = vst [vmem:[#allocation10 + $0xdc] sm:$0xf] %v1051
    %1116 = vst [vmem:[#allocation10 + $0xe4] sm:$0xf] %v1052
    %1117 = vst [vmem:[#allocation10 + $0xec] sm:$0xf] %v1053
    %1118 = vst [vmem:[#allocation10 + $0xf4] sm:$0xf] %v1054
    %1119 = vst [vmem:[#allocation10 + $0xfc] sm:$0xf] %v1055
    // Predicated region
    $region42: #{tpu_custom_call.1} parent=1 // pred_check
      _
    $region43: #{tpu_custom_call.1} parent=1 // pred_check_branch
      %1121 = sbr.rel (0) target = $region45
    $region44: #{tpu_custom_call.1} parent=1 // pred_region
      %s1123 = ssub.s32 4096, 4096
      %1124 = vsyncadd [#allocation4], %s1123
      %s1125 = sshll.u32 [#allocation10], 4
      %s1126 = int_to_ptr.vmem [resolvable:$true] %s1125
      %1131 = dma.vmem_to_hbm [thread:$0]  %s1126, 4096, %s6, [#allocation4], 128, 128, 8
    $region45: #{tpu_custom_call.1} parent=1 // pred_fallthru
      _
    // Predicated region
    $region46: #{tpu_custom_call.1} parent=1 // pred_check
      _
    $region47: #{tpu_custom_call.1} parent=1 // pred_check_branch
      %1133 = sbr.rel (0) target = $region49
    $region48: #{tpu_custom_call.1} parent=1 // pred_region
      %1134 = dma.done [#allocation4], 4096
    $region49: #{tpu_custom_call.1} parent=1 // pred_fallthru
      _
    %1135 = vsyncpa [#allocation3], 1
    %1136 = vsyncpa [#allocation6], 1
    %1137 = vsyncpa [#allocation9], 1
    %1138 = vsyncpa [#allocation4], 1

</llo_original>
